<compile_context>
chip_gen: v7x
topology: tpu7x:2x2x1
jax: 0.10.0
libtpu: 0.0.40
codegen_flags: <defaults>
</compile_context>

<pallas_src>
import functools

import jax
import jax.numpy as jnp
import numpy as np
from jax.experimental import pallas as pl
from jax.experimental.pallas import tpu as pltpu


def _dice_bce_partials_kernel(x_ref, t_ref, o_ref, *, tile, valid, apply_mask):
    """Per-tile partial sums for DiceBCE.

    x_ref : (B, C, T) logits tile (native dtype)
    t_ref : (B, C, T) targets tile (native dtype)
    o_ref : (1, 4, 128) f32 partials for this tile:
            row 0 = sum(p*t), row 1 = sum(p), row 2 = sum(t), row 3 = sum(bce),
            each lane-folded down to 128 columns.
    """
    x = x_ref[...].astype(jnp.float32)              # (B, C, T)
    t = t_ref[...].astype(jnp.float32)

    # Softmax over the channel axis (torch F.softmax implicit dim=1), written
    # as reciprocal-multiply so only B*T divides are issued (EUP-friendly).
    m = jnp.max(x, axis=1, keepdims=True)           # (B, 1, T)
    xs = x - m
    e = jnp.exp(xs)
    s = jnp.sum(e, axis=1, keepdims=True)           # (B, 1, T)
    p = e * (1.0 / s)

    # binary_cross_entropy with torch's -100 log clamp.
    # log(p) via log-softmax: a single B*T log(s) instead of a B*C*T log(p).
    log_p = jnp.maximum(xs - jnp.log(s), -100.0)
    # TODO(synk): log(1-p) cancels catastrophically as p->1; this matches
    # PyTorch's BCE-on-probabilities behavior so it is kept as-is.
    log_q = jnp.maximum(jnp.log(1.0 - p), -100.0)
    bce = -(t * log_p + (1.0 - t) * log_q)

    # Reduce the batch axis only (pure vreg adds); the channel/lane reduce is
    # deferred to the small per-tile fold below + the wrapper-side reduction.
    pt_c = jnp.sum(p * t, axis=0)                   # (C, T)
    p_c = jnp.sum(p, axis=0)
    t_c = jnp.sum(t, axis=0)
    b_c = jnp.sum(bce, axis=0)

    if apply_mask:                                  # static: only if HW was padded
        idx = (jax.lax.broadcasted_iota(jnp.int32, (1, tile), 1)
               + pl.program_id(0) * tile)
        mask = (idx < valid).astype(jnp.float32)    # (1, T)
        pt_c = pt_c * mask
        p_c = p_c * mask
        t_c = t_c * mask
        b_c = b_c * mask

    def fold(v):                                    # (C, T) -> (1, 128)
        return jnp.sum(v.reshape(-1, 128), axis=0, keepdims=True)

    o_ref[...] = jnp.concatenate(
        [fold(pt_c), fold(p_c), fold(t_c), fold(b_c)], axis=0
    )[None]                                         # (1, 4, 128), single dense store


def dice_bce_loss(inputs, targets, smooth=1.0):
    """DiceBCELoss.forward for (B, C, H, W) logits and same-shaped targets."""
    assert inputs.shape == targets.shape and inputs.ndim == 4
    B, C, H, W = inputs.shape
    HW = H * W

    if targets.dtype == jnp.bool_:
        targets = targets.astype(jnp.uint8)         # 1-byte masks stream fine

    # Native dtype pass-through; upcast happens inside the kernel.
    x = inputs.reshape(B, C, HW)
    t = targets.reshape(B, C, HW)

    # ---- VMEM-budget-driven lane tile (multiple of 128) --------------------
    per_lane_bytes = B * C * (x.dtype.itemsize + t.dtype.itemsize)
    pipeline_budget = 8 * 1024 * 1024               # 2 inputs x 2 pipeline buffers
    tile_budget = pipeline_budget // (2 * per_lane_bytes)
    temp_cap = (512 * 1024) // (B * C * 4)          # keep f32 temporaries modest (v7x VMEM)
    max_lanes = max(128, (min(tile_budget, temp_cap) // 128) * 128)

    padded128 = -(-HW // 128) * 128
    if padded128 <= max_lanes:
        tile = padded128                            # whole (padded) extent in one tile
    elif HW % 128 == 0:
        tile = 128                                  # largest 128-multiple divisor <= budget
        for cand in range(max_lanes, 127, -128):
            if HW % cand == 0:
                tile = cand
                break
    else:
        tile = max_lanes                            # pad + mask the tail tile

    padded = -(-HW // tile) * tile
    if padded != HW:
        x = jnp.pad(x, ((0, 0), (0, 0), (0, padded - HW)))
        t = jnp.pad(t, ((0, 0), (0, 0), (0, padded - HW)))
    num_tiles = padded // tile

    kernel = functools.partial(
        _dice_bce_partials_kernel, tile=tile, valid=HW, apply_mask=(padded != HW)
    )

    elems = B * C * padded
    cost = pl.CostEstimate(
        flops=12 * elems,
        transcendentals=2 * elems + 2 * B * padded,
        bytes_accessed=int(x.size * x.dtype.itemsize
                           + t.size * t.dtype.itemsize
                           + num_tiles * 4 * 128 * 4),
    )

    partials = pl.pallas_call(
        kernel,
        out_shape=jax.ShapeDtypeStruct((num_tiles, 4, 128), jnp.float32),
        grid=(num_tiles,),
        in_specs=[
            pl.BlockSpec((B, C, tile), lambda i: (0, 0, i)),
            pl.BlockSpec((B, C, tile), lambda i: (0, 0, i)),
        ],
        out_specs=pl.BlockSpec((1, 4, 128), lambda i: (i, 0, 0)),
        compiler_params=pltpu.CompilerParams(
            dimension_semantics=("parallel",),       # independent partials -> 2 TCs on v7x
            vmem_limit_bytes=32 * 1024 * 1024,
        ),
        cost_estimate=cost,
    )(x, t)

    # Tiny final reduction + scalar math in the wrapper.
    sums = jnp.sum(partials, axis=(0, 2))            # (4,)
    s_pt, s_p, s_t, s_bce = sums[0], sums[1], sums[2], sums[3]
    n_elems = float(B * C * HW)
    dice = 1.0 - (2.0 * s_pt + smooth) / (s_p + s_t + smooth)
    bce_mean = s_bce / n_elems
    return 0.5 * bce_mean + 0.5 * dice


def _reference_numpy(inputs, targets, smooth=1.0):
    """Pure numpy (float64) reference of DiceBCELoss.forward."""
    x = np.asarray(inputs, dtype=np.float64)
    t = np.asarray(targets, dtype=np.float64)
    m = x.max(axis=1, keepdims=True)
    e = np.exp(x - m)
    p = e / e.sum(axis=1, keepdims=True)
    p = p.reshape(-1)
    t = t.reshape(-1)
    intersection = (p * t).sum()
    dice = 1.0 - (2.0 * intersection + smooth) / (p.sum() + t.sum() + smooth)
    log_p = np.maximum(np.log(p), -100.0)
    log_q = np.maximum(np.log(1.0 - p), -100.0)
    bce = np.mean(-(t * log_p + (1.0 - t) * log_q))
    return 0.5 * bce + 0.5 * dice


if __name__ == "__main__":
    key = jax.random.PRNGKey(0)
    k1, k2 = jax.random.split(key)
    B, C, H, W = 2, 4, 16, 16
    inputs = jax.random.normal(k1, (B, C, H, W), dtype=jnp.float32)             # logits
    targets = (jax.random.uniform(k2, (B, C, H, W)) > 0.5).astype(jnp.float32)  # masks

    loss = dice_bce_loss(inputs, targets)
    jax.block_until_ready(loss)

    ref = _reference_numpy(inputs, targets)
    assert np.allclose(float(loss), ref, rtol=1e-4, atol=1e-4), (float(loss), ref)
    print("KERNEL_OK")
</pallas_src>

<mosaic_0001>
module attributes {stable_mosaic.version = 11 : i64} {
  func.func @_dice_bce_partials_kernel(%arg0: i32, %arg1: memref<2x4x256xf32, #tpu.memory_space<vmem>>, %arg2: memref<2x4x256xf32, #tpu.memory_space<vmem>>, %arg3: memref<1x4x128xf32, #tpu.memory_space<vmem>>) attributes {dimension_semantics = [#tpu.dimension_semantics<parallel>], iteration_bounds = array<i64: 1>, scalar_prefetch = 0 : i64, scratch_operands = 0 : i64, tpu.core_type = #tpu.core_type<tc>, window_params = [{transform_indices = @transform_0, window_bounds = array<i64: 2, 4, 256>}, {transform_indices = @transform_1, window_bounds = array<i64: 2, 4, 256>}, {transform_indices = @transform_2, window_bounds = array<i64: 1, 4, 128>}]} {
    %c0 = arith.constant 0 : index
    %c0_0 = arith.constant 0 : index
    %c0_1 = arith.constant 0 : index
    %0 = vector.load %arg1[%c0, %c0_0, %c0_1] : memref<2x4x256xf32, #tpu.memory_space<vmem>>, vector<2x4x256xf32>
    %c0_2 = arith.constant 0 : index
    %c0_3 = arith.constant 0 : index
    %c0_4 = arith.constant 0 : index
    %1 = vector.load %arg2[%c0_2, %c0_3, %c0_4] : memref<2x4x256xf32, #tpu.memory_space<vmem>>, vector<2x4x256xf32>
    %cst = arith.constant dense<0xFF800000> : vector<2x256xf32>
    %2 = vector.multi_reduction <maximumf>, %0, %cst [1] : vector<2x4x256xf32> to vector<2x256xf32>
    %3 = vector.shape_cast %2 : vector<2x256xf32> to vector<2x1x256xf32>
    %4 = vector.broadcast %3 : vector<2x1x256xf32> to vector<2x4x256xf32>
    %5 = arith.subf %0, %4 : vector<2x4x256xf32>
    %6 = math.exp %5 : vector<2x4x256xf32>
    %cst_5 = arith.constant dense<0.000000e+00> : vector<2x256xf32>
    %7 = vector.multi_reduction <add>, %6, %cst_5 [1] : vector<2x4x256xf32> to vector<2x256xf32>
    %8 = vector.shape_cast %7 : vector<2x256xf32> to vector<2x1x256xf32>
    %cst_6 = arith.constant 1.000000e+00 : f32
    %9 = vector.broadcast %cst_6 : f32 to vector<2x1x256xf32>
    %10 = arith.divf %9, %8 : vector<2x1x256xf32>
    %11 = vector.broadcast %10 : vector<2x1x256xf32> to vector<2x4x256xf32>
    %12 = arith.mulf %6, %11 : vector<2x4x256xf32>
    %13 = math.log %8 : vector<2x1x256xf32>
    %14 = vector.broadcast %13 : vector<2x1x256xf32> to vector<2x4x256xf32>
    %15 = arith.subf %5, %14 : vector<2x4x256xf32>
    %cst_7 = arith.constant -1.000000e+02 : f32
    %16 = vector.broadcast %cst_7 : f32 to vector<2x4x256xf32>
    %17 = arith.maximumf %15, %16 : vector<2x4x256xf32>
    %cst_8 = arith.constant 1.000000e+00 : f32
    %18 = vector.broadcast %cst_8 : f32 to vector<2x4x256xf32>
    %19 = arith.subf %18, %12 : vector<2x4x256xf32>
    %20 = math.log %19 : vector<2x4x256xf32>
    %cst_9 = arith.constant -1.000000e+02 : f32
    %21 = vector.broadcast %cst_9 : f32 to vector<2x4x256xf32>
    %22 = arith.maximumf %20, %21 : vector<2x4x256xf32>
    %23 = arith.mulf %1, %17 : vector<2x4x256xf32>
    %cst_10 = arith.constant 1.000000e+00 : f32
    %24 = vector.broadcast %cst_10 : f32 to vector<2x4x256xf32>
    %25 = arith.subf %24, %1 : vector<2x4x256xf32>
    %26 = arith.mulf %25, %22 : vector<2x4x256xf32>
    %27 = arith.addf %23, %26 : vector<2x4x256xf32>
    %cst_11 = arith.constant 0.000000e+00 : f32
    %28 = vector.broadcast %cst_11 : f32 to vector<2x4x256xf32>
    %29 = arith.subf %28, %27 : vector<2x4x256xf32>
    %30 = arith.mulf %12, %1 : vector<2x4x256xf32>
    %cst_12 = arith.constant dense<0.000000e+00> : vector<4x256xf32>
    %31 = vector.multi_reduction <add>, %30, %cst_12 [0] : vector<2x4x256xf32> to vector<4x256xf32>
    %cst_13 = arith.constant dense<0.000000e+00> : vector<4x256xf32>
    %32 = vector.multi_reduction <add>, %12, %cst_13 [0] : vector<2x4x256xf32> to vector<4x256xf32>
    %cst_14 = arith.constant dense<0.000000e+00> : vector<4x256xf32>
    %33 = vector.multi_reduction <add>, %1, %cst_14 [0] : vector<2x4x256xf32> to vector<4x256xf32>
    %cst_15 = arith.constant dense<0.000000e+00> : vector<4x256xf32>
    %34 = vector.multi_reduction <add>, %29, %cst_15 [0] : vector<2x4x256xf32> to vector<4x256xf32>
    %35 = vector.shape_cast %31 : vector<4x256xf32> to vector<8x128xf32>
    %cst_16 = arith.constant dense<0.000000e+00> : vector<128xf32>
    %36 = vector.multi_reduction <add>, %35, %cst_16 [0] : vector<8x128xf32> to vector<128xf32>
    %37 = vector.shape_cast %36 : vector<128xf32> to vector<1x128xf32>
    %38 = vector.shape_cast %32 : vector<4x256xf32> to vector<8x128xf32>
    %cst_17 = arith.constant dense<0.000000e+00> : vector<128xf32>
    %39 = vector.multi_reduction <add>, %38, %cst_17 [0] : vector<8x128xf32> to vector<128xf32>
    %40 = vector.shape_cast %39 : vector<128xf32> to vector<1x128xf32>
    %41 = vector.shape_cast %33 : vector<4x256xf32> to vector<8x128xf32>
    %cst_18 = arith.constant dense<0.000000e+00> : vector<128xf32>
    %42 = vector.multi_reduction <add>, %41, %cst_18 [0] : vector<8x128xf32> to vector<128xf32>
    %43 = vector.shape_cast %42 : vector<128xf32> to vector<1x128xf32>
    %44 = vector.shape_cast %34 : vector<4x256xf32> to vector<8x128xf32>
    %cst_19 = arith.constant dense<0.000000e+00> : vector<128xf32>
    %45 = vector.multi_reduction <add>, %44, %cst_19 [0] : vector<8x128xf32> to vector<128xf32>
    %46 = vector.shape_cast %45 : vector<128xf32> to vector<1x128xf32>
    %47 = tpu.concatenate %37, %40, %43, %46 in 0 : vector<1x128xf32>, vector<1x128xf32>, vector<1x128xf32>, vector<1x128xf32> -> vector<4x128xf32>
    %48 = vector.shape_cast %47 : vector<4x128xf32> to vector<1x4x128xf32>
    %c0_20 = arith.constant 0 : index
    %c0_21 = arith.constant 0 : index
    %c0_22 = arith.constant 0 : index
    %49 = vector.load %arg3[%c0_20, %c0_21, %c0_22] : memref<1x4x128xf32, #tpu.memory_space<vmem>>, vector<1x4x128xf32>
    tpu.vector_store %arg3[%c0_20, %c0_21, %c0_22], %48 {strides = array<i32>} : memref<1x4x128xf32, #tpu.memory_space<vmem>>, vector<1x4x128xf32>,
    return
  }
  func.func @transform_0(%arg0: i32) -> (i32, i32, i32) {
    %c0_i32 = arith.constant 0 : i32
    %c0_i32_0 = arith.constant 0 : i32
    %c0_i32_1 = arith.constant 0 : i32
    return %c0_i32, %c0_i32_0, %arg0 : i32, i32, i32
  }
  func.func @transform_1(%arg0: i32) -> (i32, i32, i32) {
    %c0_i32 = arith.constant 0 : i32
    %c0_i32_0 = arith.constant 0 : i32
    %c0_i32_1 = arith.constant 0 : i32
    return %c0_i32, %c0_i32_0, %arg0 : i32, i32, i32
  }
  func.func @transform_2(%arg0: i32) -> (i32, i32, i32) {
    %c0_i32 = arith.constant 0 : i32
    %c0_i32_0 = arith.constant 0 : i32
    %c0_i32_1 = arith.constant 0 : i32
    return %arg0, %c0_i32, %c0_i32_0 : i32, i32, i32
  }
}

</mosaic_0001>

<llo_original>
// kernel: tpu_custom_call.1
$region0: #{tpu_custom_call.1}
  #allocation0 [shape = 'u32[]', space=smem, size = 0x4, offset = 0x4, fixed_abs, tag = 'smem constant byte address 0x4 - core index']
  #allocation1 [shape = 'u32[144,128]{1,0:T(1,128)}', space=vmem, size = 0x12000, scoped, tag = 'internal scratch']
  %s0 = inlined_call_operand.hbm [shape: f32[2,4,256], index: 0, kind: input, shape index: {}]
  %s1 = inlined_call_operand.hbm [shape: f32[2,4,256], index: 1, kind: input, shape index: {}]
  %s2 = inlined_call_operand.hbm [shape: f32[1,4,128], index: 2, kind: output, shape index: {}]
  %s3 = sld [smem:[#allocation0]]
  $region26: #{tpu_custom_call.1} parent=0
    _
  %s5 = ssub.s32 1, %s3
  %s6 = scalar_select 0, %s5, %s3
  $region1: #{tpu_custom_call.1} parent=0
    #allocation2 [shape = 'u8[8192]{0}', space=vmem, size = 0x2000, scoped, tag = 'input window, operand 0, single buffered']
    #allocation3 [shape = 's32[1]{0}', space=sflag, size = 0x4, scoped, tag = 'scoped memory for tpu_custom_call.1']
    #allocation4 [shape = 's32[1]{0}', space=sflag, size = 0x4, scoped, tag = 'scoped memory for tpu_custom_call.1']
    #allocation5 [shape = 'u8[8192]{0}', space=vmem, size = 0x2000, scoped, tag = 'input window, operand 1, single buffered']
    #allocation6 [shape = 's32[1]{0}', space=sflag, size = 0x4, scoped, tag = 'scoped memory for tpu_custom_call.1']
    #allocation7 [shape = 'u8[2048]{0}', space=vmem, size = 0x800, scoped, tag = 'output window, operand 0, single buffered']
    %7 = vsyncpa [#allocation3], 0
    %8 = vsyncpa [#allocation6], 0
    %9 = vsyncpa [#allocation4], 0
    // Predicated region
    $region2: #{tpu_custom_call.1} parent=1 // pred_check
      _
    $region3: #{tpu_custom_call.1} parent=1 // pred_check_branch
      %11 = sbr.rel (0) target = $region5
    $region4: #{tpu_custom_call.1} parent=1 // pred_region
      %s13 = ssub.s32 256, 256
      %14 = vsyncadd [#allocation3], %s13
      %s15 = sshll.u32 [#allocation2], 4
      %s16 = int_to_ptr.vmem [resolvable:$true] %s15
      %21 = dma.hbm_to_vmem [thread:$0]  %s0, 256, %s16, [#allocation3], 128, 128, 8
    $region5: #{tpu_custom_call.1} parent=1 // pred_fallthru
      _
    // Predicated region
    $region6: #{tpu_custom_call.1} parent=1 // pred_check
      _
    $region7: #{tpu_custom_call.1} parent=1 // pred_check_branch
      %23 = sbr.rel (0) target = $region9
    $region8: #{tpu_custom_call.1} parent=1 // pred_region
      %s25 = ssub.s32 256, 256
      %26 = vsyncadd [#allocation6], %s25
      %s27 = sshll.u32 [#allocation5], 4
      %s28 = int_to_ptr.vmem [resolvable:$true] %s27
      %33 = dma.hbm_to_vmem [thread:$0]  %s1, 256, %s28, [#allocation6], 128, 128, 8
    $region9: #{tpu_custom_call.1} parent=1 // pred_fallthru
      _
    // Predicated region
    $region10: #{tpu_custom_call.1} parent=1 // pred_check
      _
    $region11: #{tpu_custom_call.1} parent=1 // pred_check_branch
      %35 = sbr.rel (0) target = $region13
    $region12: #{tpu_custom_call.1} parent=1 // pred_region
      %36 = dma.done [#allocation3], 256
    $region13: #{tpu_custom_call.1} parent=1 // pred_fallthru
      _
    // Predicated region
    $region14: #{tpu_custom_call.1} parent=1 // pred_check
      _
    $region15: #{tpu_custom_call.1} parent=1 // pred_check_branch
      %38 = sbr.rel (0) target = $region17
    $region16: #{tpu_custom_call.1} parent=1 // pred_region
      %39 = dma.done [#allocation6], 256
    $region17: #{tpu_custom_call.1} parent=1 // pred_fallthru
      _
    %v40 = vld [vmem:[#allocation2] sm:$0xff]
    %v41 = vld [vmem:[#allocation2 + $0x8] sm:$0xff]
    %v42 = vld [vmem:[#allocation5] sm:$0xff]
    %v43 = vld [vmem:[#allocation5 + $0x8] sm:$0xff]
    %v46 = vcombine.high %v40, %v40
    %v47 = vcombine.high %v41, %v41
    %vm50 = vcmask 1043456
    %v51 = vsel %vm50, %v40, -inf
    %v52 = vrot.slane %v51, 4
    %v53 = vmax.f32 %v51, %v52
    %v54 = vrot.slane %v53, 2
    %v55 = vmax.f32 %v53, %v54
    %v56 = vrot.slane %v55, 1
    %v57 = vmax.f32 %v55, %v56
    %v58 = vsel %vm50, %v46, -inf
    %v59 = vrot.slane %v58, 4
    %v60 = vmax.f32 %v58, %v59
    %v61 = vrot.slane %v60, 2
    %v62 = vmax.f32 %v60, %v61
    %v63 = vrot.slane %v62, 1
    %v64 = vmax.f32 %v62, %v63
    %v65 = vsel %vm50, %v41, -inf
    %v66 = vrot.slane %v65, 4
    %v67 = vmax.f32 %v65, %v66
    %v68 = vrot.slane %v67, 2
    %v69 = vmax.f32 %v67, %v68
    %v70 = vrot.slane %v69, 1
    %v71 = vmax.f32 %v69, %v70
    %v72 = vsel %vm50, %v47, -inf
    %v73 = vrot.slane %v72, 4
    %v74 = vmax.f32 %v72, %v73
    %v75 = vrot.slane %v74, 2
    %v76 = vmax.f32 %v74, %v75
    %v77 = vrot.slane %v76, 1
    %v78 = vmax.f32 %v76, %v77
    %v83 = vcombine.low %v57, %v64
    %v84 = vcombine.low %v71, %v78
    %v87 = vsub.f32 %v40, %v83
    %v88 = vsub.f32 %v41, %v84
    %v89 = vmul.f32 %v87, 1.442695
    %v90 = vpow.pop %v89
    %v91 = vmul.f32 %v88, 1.442695
    %v92 = vpow.pop %v91
    %v95 = vcombine.high %v90, %v90
    %v96 = vcombine.high %v92, %v92
    %v99 = vsel %vm50, %v90, 0.0
    %v100 = vrot.slane %v99, 4
    %v101 = vadd.f32 %v99, %v100
    %v102 = vrot.slane %v101, 2
    %v103 = vadd.f32 %v101, %v102
    %v104 = vrot.slane %v103, 1
    %v105 = vadd.f32 %v103, %v104
    %v106 = vsel %vm50, %v95, 0.0
    %v107 = vrot.slane %v106, 4
    %v108 = vadd.f32 %v106, %v107
    %v109 = vrot.slane %v108, 2
    %v110 = vadd.f32 %v108, %v109
    %v111 = vrot.slane %v110, 1
    %v112 = vadd.f32 %v110, %v111
    %v113 = vsel %vm50, %v92, 0.0
    %v114 = vrot.slane %v113, 4
    %v115 = vadd.f32 %v113, %v114
    %v116 = vrot.slane %v115, 2
    %v117 = vadd.f32 %v115, %v116
    %v118 = vrot.slane %v117, 1
    %v119 = vadd.f32 %v117, %v118
    %v120 = vsel %vm50, %v96, 0.0
    %v121 = vrot.slane %v120, 4
    %v122 = vadd.f32 %v120, %v121
    %v123 = vrot.slane %v122, 2
    %v124 = vadd.f32 %v122, %v123
    %v125 = vrot.slane %v124, 1
    %v126 = vadd.f32 %v124, %v125
    %v127 = vrcp.pop %v105
    %v128 = vmul.f32 1.0, %v127
    %v129 = vrcp.pop %v112
    %v130 = vmul.f32 1.0, %v129
    %v131 = vrcp.pop %v119
    %v132 = vmul.f32 1.0, %v131
    %v133 = vrcp.pop %v126
    %v134 = vmul.f32 1.0, %v133
    %v139 = vcombine.low %v128, %v130
    %v140 = vcombine.low %v132, %v134
    %v143 = vmul.f32 %v90, %v139
    %v144 = vmul.f32 %v92, %v140
    %v145 = vlog2.pop %v105
    %v146 = vmul.f32 %v145, 0.6931472
    %v147 = vlog2.pop %v112
    %v148 = vmul.f32 %v147, 0.6931472
    %v149 = vlog2.pop %v119
    %v150 = vmul.f32 %v149, 0.6931472
    %v151 = vlog2.pop %v126
    %v152 = vmul.f32 %v151, 0.6931472
    %v157 = vcombine.low %v146, %v148
    %v158 = vcombine.low %v150, %v152
    %v161 = vsub.f32 %v87, %v157
    %v162 = vsub.f32 %v88, %v158
    %v163 = vmax.f32 %v161, -100.0
    %v164 = vmax.f32 %v162, -100.0
    %v165 = vsub.f32 1.0, %v143
    %v166 = vsub.f32 1.0, %v144
    %v167 = vlog2.pop %v165
    %v168 = vmul.f32 %v167, 0.6931472
    %v169 = vlog2.pop %v166
    %v170 = vmul.f32 %v169, 0.6931472
    %v171 = vmax.f32 %v168, -100.0
    %v172 = vmax.f32 %v170, -100.0
    %v173 = vmul.f32 %v42, %v163
    %v174 = vmul.f32 %v43, %v164
    %v175 = vsub.f32 1.0, %v42
    %v176 = vsub.f32 1.0, %v43
    %v177 = vmul.f32 %v175, %v171
    %v178 = vmul.f32 %v176, %v172
    %v179 = vadd.f32 %v173, %v177
    %v180 = vadd.f32 %v174, %v178
    %v181 = vsub.f32 0.0, %v179
    %v182 = vsub.f32 0.0, %v180
    %v183 = vmul.f32 %v143, %v42
    %v184 = vmul.f32 %v144, %v43
    %v187 = vcombine.high %v183, %v183
    %v188 = vcombine.high %v184, %v184
    %v191 = vsel %vm50, %v183, 0.0
    %v192 = vsel %vm50, %v184, 0.0
    %v193 = vadd.f32 %v191, %v192
    %v194 = vsel %vm50, %v187, 0.0
    %v195 = vsel %vm50, %v188, 0.0
    %v196 = vadd.f32 %v194, %v195
    %v199 = vcombine.high %v143, %v143
    %v200 = vcombine.high %v144, %v144
    %v203 = vsel %vm50, %v143, 0.0
    %v204 = vsel %vm50, %v144, 0.0
    %v205 = vadd.f32 %v203, %v204
    %v206 = vsel %vm50, %v199, 0.0
    %v207 = vsel %vm50, %v200, 0.0
    %v208 = vadd.f32 %v206, %v207
    %v211 = vcombine.high %v42, %v42
    %v212 = vcombine.high %v43, %v43
    %v215 = vsel %vm50, %v42, 0.0
    %v216 = vsel %vm50, %v43, 0.0
    %v217 = vadd.f32 %v215, %v216
    %v218 = vsel %vm50, %v211, 0.0
    %v219 = vsel %vm50, %v212, 0.0
    %v220 = vadd.f32 %v218, %v219
    %v223 = vcombine.high %v181, %v181
    %v224 = vcombine.high %v182, %v182
    %v227 = vsel %vm50, %v181, 0.0
    %v228 = vsel %vm50, %v182, 0.0
    %v229 = vadd.f32 %v227, %v228
    %v230 = vsel %vm50, %v223, 0.0
    %v231 = vsel %vm50, %v224, 0.0
    %v232 = vadd.f32 %v230, %v231
    %v235 = vcombine.low %v193, %v196
    %v238 = vunpack.c.l.s4 1935823168
    %v239 = vunpack.c.0.s8 %v238
    %v240 = vlaneseq
    %v241 = vshrl.u32 %v240, 7
    %v242 = vsub.s32 %v239, %v241
    %v243 = vrot.slane %v235, %v242
    %v244 = vrot.slane %v243, 4
    %v245 = vadd.f32 %v243, %v244
    %v246 = vrot.slane %v245, 2
    %v247 = vadd.f32 %v245, %v246
    %v248 = vrot.slane %v247, 1
    %v249 = vadd.f32 %v247, %v248
    %v252 = vcombine.low %v205, %v208
    %v255 = vunpack.c.l.s4 1935823168
    %v256 = vunpack.c.0.s8 %v255
    %v257 = vlaneseq
    %v258 = vshrl.u32 %v257, 7
    %v259 = vsub.s32 %v256, %v258
    %v260 = vrot.slane %v252, %v259
    %v261 = vrot.slane %v260, 4
    %v262 = vadd.f32 %v260, %v261
    %v263 = vrot.slane %v262, 2
    %v264 = vadd.f32 %v262, %v263
    %v265 = vrot.slane %v264, 1
    %v266 = vadd.f32 %v264, %v265
    %v269 = vcombine.low %v217, %v220
    %v272 = vunpack.c.l.s4 1935823168
    %v273 = vunpack.c.0.s8 %v272
    %v274 = vlaneseq
    %v275 = vshrl.u32 %v274, 7
    %v276 = vsub.s32 %v273, %v275
    %v277 = vrot.slane %v269, %v276
    %v278 = vrot.slane %v277, 4
    %v279 = vadd.f32 %v277, %v278
    %v280 = vrot.slane %v279, 2
    %v281 = vadd.f32 %v279, %v280
    %v282 = vrot.slane %v281, 1
    %v283 = vadd.f32 %v281, %v282
    %v286 = vcombine.low %v229, %v232
    %v289 = vunpack.c.l.s4 1935823168
    %v290 = vunpack.c.0.s8 %v289
    %v291 = vlaneseq
    %v292 = vshrl.u32 %v291, 7
    %v293 = vsub.s32 %v290, %v292
    %v294 = vrot.slane %v286, %v293
    %v295 = vrot.slane %v294, 4
    %v296 = vadd.f32 %v294, %v295
    %v297 = vrot.slane %v296, 2
    %v298 = vadd.f32 %v296, %v297
    %v299 = vrot.slane %v298, 1
    %v300 = vadd.f32 %v298, %v299
    %vm301 = vcmask 1040384
    %v302 = vsel %vm301, %v249, %v266
    %vm303 = vcmask 1041408
    %v304 = vsel %vm303, %v302, %v283
    %vm305 = vcmask 1042432
    %v306 = vsel %vm305, %v304, %v300
    %307 = vst [vmem:[#allocation7] sm:$0xf] %v306
    // Predicated region
    $region18: #{tpu_custom_call.1} parent=1 // pred_check
      _
    $region19: #{tpu_custom_call.1} parent=1 // pred_check_branch
      %309 = sbr.rel (0) target = $region21
    $region20: #{tpu_custom_call.1} parent=1 // pred_region
      %s311 = ssub.s32 64, 64
      %312 = vsyncadd [#allocation4], %s311
      %s314 = sshll.u32 [#allocation7], 4
      %s315 = int_to_ptr.vmem [resolvable:$true] %s314
      %317 = dma.vmem_to_hbm [thread:$0]  %s315, 64, %s2, [#allocation4]
    $region21: #{tpu_custom_call.1} parent=1 // pred_fallthru
      _
    // Predicated region
    $region22: #{tpu_custom_call.1} parent=1 // pred_check
      _
    $region23: #{tpu_custom_call.1} parent=1 // pred_check_branch
      %319 = sbr.rel (0) target = $region25
    $region24: #{tpu_custom_call.1} parent=1 // pred_region
      %320 = dma.done [#allocation4], 64
    $region25: #{tpu_custom_call.1} parent=1 // pred_fallthru
      _
    %321 = vsyncpa [#allocation3], 1
    %322 = vsyncpa [#allocation6], 1
    %323 = vsyncpa [#allocation4], 1

</llo_original>
